<compile_context>
chip_gen: v7x
topology: tpu7x:2x2x1
jax: 0.10.0
libtpu: 0.0.40
codegen_flags: <defaults>
</compile_context>

<pallas_src>
import functools

import jax
import jax.numpy as jnp
import numpy as np
from jax.experimental import pallas as pl
from jax.experimental.pallas import tpu as pltpu


# ----------------------------------------------------------------------------
# Kernel: one (block_rows, D) tile per grid step.
#   z   = X + Y                                  (dropout identity, eval mode)
#   out = (z - mean) * rsqrt(var + eps) * gamma + beta
# Reductions are along the last (lane) dim only -> tiles are independent, so
# the single row-grid axis is "parallel" (megacore-shardable on v7x).
# ----------------------------------------------------------------------------
def _addnorm_kernel(x_ref, y_ref, gamma_ref, beta_ref, o_ref, *, eps):
    x = x_ref[...].astype(jnp.float32)
    y = y_ref[...].astype(jnp.float32)
    z = x + y

    mean = jnp.mean(z, axis=-1, keepdims=True)
    c = z - mean
    var = jnp.mean(c * c, axis=-1, keepdims=True)      # biased, like torch LN
    inv = jax.lax.rsqrt(var + eps)                     # EUP, f32

    gamma = gamma_ref[...].astype(jnp.float32)         # (1, D), broadcast
    beta = beta_ref[...].astype(jnp.float32)
    o_ref[...] = (c * inv * gamma + beta).astype(o_ref.dtype)


def _vmem_capacity_bytes():
    try:
        return int(pltpu.get_tpu_info().vmem_capacity_bytes)
    except Exception:
        return 64 << 20  # assume the smallest per-TC VMEM (v7x) if query fails


def _choose_block_rows(N, D, itemsize, vmem_cap):
    """Pick the row-tile size from bytes, VMEM budget and megacore constraints."""
    sub = max(8, 32 // itemsize)            # sublane packing: 8 f32 / 16 bf16 / 32 i8
    row_bytes = 3 * D * itemsize            # X + Y + out streamed per row
    br = max(1, (6 << 20) // row_bytes)     # ~6 MiB of streamed data per grid step
    budget = min(vmem_cap // 2, 48 << 20)   # conservative double-buffer budget
    br = min(br, max(1, budget // (2 * row_bytes)))
    if N >= 2 * sub:
        br = min(br, N // 2)                # guarantee >= 2 grid steps (2 TCs on v7x)
    if br >= N:
        return N                            # single full-extent block is legal
    return max(sub, (br // sub) * sub)      # keep (8,128)/packing constraint


def add_norm(x, y, gamma, beta, *, eps=1e-5, min_pallas_bytes=0):
    """Fused AddNorm: LayerNorm(x + y) over the last dim.

    x, y: (..., D)  (f32 or bf16; bf16 I/O recommended -- math stays f32)
    gamma, beta: (D,) or (1, D)
    """
    assert x.shape == y.shape
    orig_shape = x.shape
    D = orig_shape[-1]

    x2 = x.reshape(-1, D)
    y2 = y.reshape(-1, D)
    N = x2.shape[0]
    itemsize = jnp.dtype(x.dtype).itemsize

    # Tiny-input fallback (launch + un-overlapped DMA would dominate).
    if 3 * N * D * itemsize < min_pallas_bytes:
        return add_norm_ref(x, y, gamma, beta, eps=eps)

    gamma2 = jnp.asarray(gamma, jnp.float32).reshape(1, D)
    beta2 = jnp.asarray(beta, jnp.float32).reshape(1, D)

    vmem_cap = _vmem_capacity_bytes()
    br = _choose_block_rows(N, D, itemsize, vmem_cap)
    grid = (pl.cdiv(N, br),)

    # Actual VMEM need: double-buffered X/Y/out tiles + gamma/beta + slack.
    needed = 2 * 3 * br * D * itemsize + 2 * 2 * D * 4 + (2 << 20)
    vmem_limit = int(min(max(needed, 16 << 20), vmem_cap // 2))

    cost = pl.CostEstimate(
        flops=8 * N * D,
        transcendentals=N,
        bytes_accessed=3 * N * D * itemsize + 2 * D * 4,
    )

    out = pl.pallas_call(
        functools.partial(_addnorm_kernel, eps=eps),
        out_shape=jax.ShapeDtypeStruct((N, D), x.dtype),
        grid_spec=pltpu.PrefetchScalarGridSpec(
            num_scalar_prefetch=0,
            grid=grid,
            in_specs=[
                pl.BlockSpec((br, D), lambda i: (i, 0)),   # X tile
                pl.BlockSpec((br, D), lambda i: (i, 0)),   # Y tile
                pl.BlockSpec((1, D), lambda i: (0, 0)),    # gamma (resident)
                pl.BlockSpec((1, D), lambda i: (0, 0)),    # beta  (resident)
            ],
            out_specs=pl.BlockSpec((br, D), lambda i: (i, 0)),
        ),
        compiler_params=pltpu.CompilerParams(
            dimension_semantics=("parallel",),
            vmem_limit_bytes=vmem_limit,
        ),
        cost_estimate=cost,
    )(x2, y2, gamma2, beta2)
    return out.reshape(orig_shape)


# ----------------------------------------------------------------------------
# Pure-JAX reference (same math, f32 accumulation) for the correctness check.
# ----------------------------------------------------------------------------
def add_norm_ref(x, y, gamma, beta, eps=1e-5):
    z = x.astype(jnp.float32) + y.astype(jnp.float32)
    mean = jnp.mean(z, axis=-1, keepdims=True)
    c = z - mean
    var = jnp.mean(c * c, axis=-1, keepdims=True)
    g = jnp.asarray(gamma, jnp.float32).reshape((1,) * (z.ndim - 1) + (-1,))
    b = jnp.asarray(beta, jnp.float32).reshape((1,) * (z.ndim - 1) + (-1,))
    return (c * jax.lax.rsqrt(var + eps) * g + b).astype(x.dtype)


if __name__ == "__main__":
    # Small, lane-dense shapes: (batch, seq, d_model). N = 2*64 = 128 rows, so
    # the byte-sized tile (capped at N//2) gives a 2-step "parallel" grid.
    B, S, D = 2, 64, 256
    DROPOUT = 0.1  # eval-mode forward: dropout is the identity

    key = jax.random.PRNGKey(0)
    kx, ky, kg, kb = jax.random.split(key, 4)
    X = jax.random.normal(kx, (B, S, D), jnp.float32)
    Y = jax.random.normal(ky, (B, S, D), jnp.float32)
    gamma = (1.0 + 0.1 * jax.random.normal(kg, (D,))).astype(jnp.float32)
    beta = (0.1 * jax.random.normal(kb, (D,))).astype(jnp.float32)

    # f32 I/O path
    out = jax.block_until_ready(add_norm(X, Y, gamma, beta))
    ref = add_norm_ref(X, Y, gamma, beta)
    np.testing.assert_allclose(np.asarray(out), np.asarray(ref),
                               rtol=1e-4, atol=1e-4)
    assert out.shape == (B, S, D) and out.dtype == X.dtype

    # bf16 I/O path (preferred for this bandwidth-bound kernel; math is f32)
    Xb, Yb = X.astype(jnp.bfloat16), Y.astype(jnp.bfloat16)
    outb = jax.block_until_ready(add_norm(Xb, Yb, gamma, beta))
    refb = add_norm_ref(Xb, Yb, gamma, beta)
    np.testing.assert_allclose(np.asarray(outb, np.float32),
                               np.asarray(refb, np.float32),
                               rtol=5e-2, atol=5e-2)
    assert outb.shape == (B, S, D) and outb.dtype == jnp.bfloat16

    print("KERNEL_OK")
</pallas_src>

<mosaic_0001>
module attributes {stable_mosaic.version = 11 : i64} {
  func.func @_addnorm_kernel(%arg0: i32, %arg1: memref<64x256xf32, #tpu.memory_space<vmem>>, %arg2: memref<64x256xf32, #tpu.memory_space<vmem>>, %arg3: memref<1x256xf32, #tpu.memory_space<vmem>>, %arg4: memref<1x256xf32, #tpu.memory_space<vmem>>, %arg5: memref<64x256xf32, #tpu.memory_space<vmem>>) attributes {dimension_semantics = [#tpu.dimension_semantics<parallel>], iteration_bounds = array<i64: 2>, scalar_prefetch = 0 : i64, scratch_operands = 0 : i64, tpu.core_type = #tpu.core_type<tc>, window_params = [{transform_indices = @transform_0, window_bounds = array<i64: 64, 256>}, {transform_indices = @transform_1, window_bounds = array<i64: 64, 256>}, {pipeline_mode = #tpu.pipeline_mode<synchronous>, transform_indices = @transform_2, window_bounds = array<i64: 1, 256>}, {pipeline_mode = #tpu.pipeline_mode<synchronous>, transform_indices = @transform_3, window_bounds = array<i64: 1, 256>}, {transform_indices = @transform_4, window_bounds = array<i64: 64, 256>}]} {
    %c0 = arith.constant 0 : index
    %c0_0 = arith.constant 0 : index
    %0 = vector.load %arg1[%c0, %c0_0] : memref<64x256xf32, #tpu.memory_space<vmem>>, vector<64x256xf32>
    %c0_1 = arith.constant 0 : index
    %c0_2 = arith.constant 0 : index
    %1 = vector.load %arg2[%c0_1, %c0_2] : memref<64x256xf32, #tpu.memory_space<vmem>>, vector<64x256xf32>
    %2 = arith.addf %0, %1 : vector<64x256xf32>
    %cst = arith.constant dense<0.000000e+00> : vector<64xf32>
    %3 = vector.multi_reduction <add>, %2, %cst [1] : vector<64x256xf32> to vector<64xf32>
    %4 = vector.shape_cast %3 : vector<64xf32> to vector<64x1xf32>
    %cst_3 = arith.constant 2.560000e+02 : f32
    %5 = vector.broadcast %cst_3 : f32 to vector<64x1xf32>
    %6 = arith.divf %4, %5 : vector<64x1xf32>
    %7 = vector.broadcast %6 : vector<64x1xf32> to vector<64x256xf32>
    %8 = arith.subf %2, %7 : vector<64x256xf32>
    %9 = arith.mulf %8, %8 : vector<64x256xf32>
    %cst_4 = arith.constant dense<0.000000e+00> : vector<64xf32>
    %10 = vector.multi_reduction <add>, %9, %cst_4 [1] : vector<64x256xf32> to vector<64xf32>
    %11 = vector.shape_cast %10 : vector<64xf32> to vector<64x1xf32>
    %cst_5 = arith.constant 2.560000e+02 : f32
    %12 = vector.broadcast %cst_5 : f32 to vector<64x1xf32>
    %13 = arith.divf %11, %12 : vector<64x1xf32>
    %cst_6 = arith.constant 9.99999974E-6 : f32
    %14 = vector.broadcast %cst_6 : f32 to vector<64x1xf32>
    %15 = arith.addf %13, %14 : vector<64x1xf32>
    %16 = math.rsqrt %15 : vector<64x1xf32>
    %c0_7 = arith.constant 0 : index
    %c0_8 = arith.constant 0 : index
    %17 = vector.load %arg3[%c0_7, %c0_8] : memref<1x256xf32, #tpu.memory_space<vmem>>, vector<1x256xf32>
    %c0_9 = arith.constant 0 : index
    %c0_10 = arith.constant 0 : index
    %18 = vector.load %arg4[%c0_9, %c0_10] : memref<1x256xf32, #tpu.memory_space<vmem>>, vector<1x256xf32>
    %19 = vector.broadcast %16 : vector<64x1xf32> to vector<64x256xf32>
    %20 = arith.mulf %8, %19 : vector<64x256xf32>
    %21 = vector.broadcast %17 : vector<1x256xf32> to vector<64x256xf32>
    %22 = arith.mulf %20, %21 : vector<64x256xf32>
    %23 = vector.broadcast %18 : vector<1x256xf32> to vector<64x256xf32>
    %24 = arith.addf %22, %23 : vector<64x256xf32>
    %c0_11 = arith.constant 0 : index
    %c0_12 = arith.constant 0 : index
    %25 = vector.load %arg5[%c0_11, %c0_12] : memref<64x256xf32, #tpu.memory_space<vmem>>, vector<64x256xf32>
    tpu.vector_store %arg5[%c0_11, %c0_12], %24 {strides = array<i32>} : memref<64x256xf32, #tpu.memory_space<vmem>>, vector<64x256xf32>,
    return
  }
  func.func @transform_0(%arg0: i32) -> (i32, i32) {
    %c0_i32 = arith.constant 0 : i32
    %c0_i32_0 = arith.constant 0 : i32
    return %arg0, %c0_i32 : i32, i32
  }
  func.func @transform_1(%arg0: i32) -> (i32, i32) {
    %c0_i32 = arith.constant 0 : i32
    %c0_i32_0 = arith.constant 0 : i32
    return %arg0, %c0_i32 : i32, i32
  }
  func.func @transform_2(%arg0: i32) -> (i32, i32) {
    %c0_i32 = arith.constant 0 : i32
    %c0_i32_0 = arith.constant 0 : i32
    %c0_i32_1 = arith.constant 0 : i32
    return %c0_i32, %c0_i32_0 : i32, i32
  }
  func.func @transform_3(%arg0: i32) -> (i32, i32) {
    %c0_i32 = arith.constant 0 : i32
    %c0_i32_0 = arith.constant 0 : i32
    %c0_i32_1 = arith.constant 0 : i32
    return %c0_i32, %c0_i32_0 : i32, i32
  }
  func.func @transform_4(%arg0: i32) -> (i32, i32) {
    %c0_i32 = arith.constant 0 : i32
    %c0_i32_0 = arith.constant 0 : i32
    return %arg0, %c0_i32 : i32, i32
  }
}

</mosaic_0001>

<llo_original>
// kernel: tpu_custom_call.1
$region0: #{tpu_custom_call.1}
  #allocation0 [shape = 'u32[]', space=smem, size = 0x4, offset = 0x4, fixed_abs, tag = 'smem constant byte address 0x4 - core index']
  #allocation1 [shape = 'u32[144,128]{1,0:T(1,128)}', space=vmem, size = 0x12000, scoped, tag = 'internal scratch']
  %s0 = inlined_call_operand.hbm [shape: f32[128,256], index: 0, kind: input, shape index: {}]
  %s1 = inlined_call_operand.hbm [shape: f32[128,256], index: 1, kind: input, shape index: {}]
  %s2 = inlined_call_operand.vmem [shape: f32[1,256], index: 2, kind: input, shape index: {}]
  %s3 = inlined_call_operand.vmem [shape: f32[1,256], index: 3, kind: input, shape index: {}]
  %s4 = inlined_call_operand.hbm [shape: f32[128,256], index: 4, kind: output, shape index: {}]
  %s5 = sld [smem:[#allocation0]]
  $region57: #{tpu_custom_call.1} parent=0
    _
  %s7 = ssub.s32 1, %s5
  %s8 = scalar_select 0, %s7, %s5
  $region1: #{tpu_custom_call.1} parent=0
    #allocation2 [shape = 'u8[131072]{0}', space=vmem, size = 0x20000, scoped, tag = 'input window, operand 0']
    #allocation3 [shape = 's32[2]{0}', space=sflag, size = 0x8, scoped, tag = 'scoped memory for tpu_custom_call.1']
    #allocation4 [shape = 's32[2]{0}', space=sflag, size = 0x8, scoped, tag = 'scoped memory for tpu_custom_call.1']
    #allocation5 [shape = 'u8[131072]{0}', space=vmem, size = 0x20000, scoped, tag = 'input window, operand 1']
    #allocation6 [shape = 's32[2]{0}', space=sflag, size = 0x8, scoped, tag = 'scoped memory for tpu_custom_call.1']
    #allocation7 [shape = 'u8[131072]{0}', space=vmem, size = 0x20000, scoped, tag = 'output window, operand 0']
    %9 = vsyncpa [#allocation3], 0
    %s10 = scalar_lea.sflag [#allocation3], 1
    %11 = vsyncpa %s10, 0
    %12 = vsyncpa [#allocation6], 0
    %s13 = scalar_lea.sflag [#allocation6], 1
    %14 = vsyncpa %s13, 0
    %15 = vsyncpa [#allocation4], 0
    %s16 = scalar_lea.sflag [#allocation4], 1
    %17 = vsyncpa %s16, 0
    loop: start=0, step=1, limit=4
    $region2: #{tpu_custom_call.1} parent=1 // loop_pre_header
      _
    $region3: #{tpu_custom_call.1} parent=1 // loop_header
      %s19 = sphi 0, %s23
      %p20 = scmp.ge.s32.totalorder %s19, 4
      %s29 = sphi 0, %s31
      %s32 = sphi 0, %s29
      %s33 = sphi 0, %s32
      %s49 = sphi 0, %s33
      %s55 = sphi 0, %s57
      %s58 = sphi 0, %s55
      %s59 = sphi 0, %s58
      %s75 = sphi 0, %s59
      %s79 = sphi 0, %s79
      %s81 = sphi 0, %s79
      %s82 = sphi 0, %s81
      %s96 = sphi 0, %s82
      %s100 = sphi 0, %s100
      %s102 = sphi 0, %s100
      %s103 = sphi 0, %s102
      %s117 = sphi 0, %s103
      %s123 = sphi 0, %s125
      %s126 = sphi 0, %s123
      %s127 = sphi 0, %s126
      %s143 = sphi 0, %s127
    $region4: #{tpu_custom_call.1} parent=1 // loop_header_branch
      %22 = sbr.rel (%p20) target = $region8
    $region5: #{tpu_custom_call.1} parent=1 // loop_body
      %s24 = ssub.s32 %s19, 1
      %s25 = ssub.s32 %s19, 2
      %s26 = sadd.s32 %s19, 1
      %s27 = ssub.s32 %s19, %s26
      %p28 = scmp.eq.s32.totalorder %s27, 0
      %s30 = sadd.s32 %s29, 1
      %s31 = scalar_select %p28, %s29, %s30
      %p34 = pneg %p28
      %p35 = scmp.eq.s32.totalorder %s19, 1
      %p36 = por %p34, %p35
      %p37 = scmp.ne.s32.totalorder %s29, %s32
      %p38 = scmp.eq.s32.totalorder %s19, 0
      %p39 = por %p37, %p38
      %p40 = scmp.ne.s32.totalorder %s29, %s32
      %p41 = scmp.eq.s32.totalorder %s24, 1
      %p42 = por %p40, %p41
      %p43 = scmp.ne.s32.totalorder %s32, %s33
      %p44 = scmp.eq.s32.totalorder %s24, 0
      %p45 = por %p43, %p44
      %p46 = scmp.ne.s32.totalorder %s32, %s33
      %p47 = scmp.eq.s32.totalorder %s25, 1
      %p48 = por %p46, %p47
      %p50 = scmp.ne.s32.totalorder %s33, %s49
      %p51 = scmp.eq.s32.totalorder %s25, 0
      %p52 = por %p50, %p51
      %s53 = ssub.s32 %s19, %s26
      %p54 = scmp.eq.s32.totalorder %s53, 0
      %s56 = sadd.s32 %s55, 1
      %s57 = scalar_select %p54, %s55, %s56
      %p60 = pneg %p54
      %p61 = scmp.eq.s32.totalorder %s19, 1
      %p62 = por %p60, %p61
      %p63 = scmp.ne.s32.totalorder %s55, %s58
      %p64 = scmp.eq.s32.totalorder %s19, 0
      %p65 = por %p63, %p64
      %p66 = scmp.ne.s32.totalorder %s55, %s58
      %p67 = scmp.eq.s32.totalorder %s24, 1
      %p68 = por %p66, %p67
      %p69 = scmp.ne.s32.totalorder %s58, %s59
      %p70 = scmp.eq.s32.totalorder %s24, 0
      %p71 = por %p69, %p70
      %p72 = scmp.ne.s32.totalorder %s58, %s59
      %p73 = scmp.eq.s32.totalorder %s25, 1
      %p74 = por %p72, %p73
      %p76 = scmp.ne.s32.totalorder %s59, %s75
      %p77 = scmp.eq.s32.totalorder %s25, 0
      %p78 = por %p76, %p77
      %s80 = sadd.s32 %s79, 1
      %p83 = scmp.eq.s32.totalorder %s19, 1
      %p84 = scmp.ne.s32.totalorder %s79, %s81
      %p85 = scmp.eq.s32.totalorder %s19, 0
      %p86 = por %p84, %p85
      %p87 = scmp.ne.s32.totalorder %s79, %s81
      %p88 = scmp.eq.s32.totalorder %s24, 1
      %p89 = por %p87, %p88
      %p90 = scmp.ne.s32.totalorder %s81, %s82
      %p91 = scmp.eq.s32.totalorder %s24, 0
      %p92 = por %p90, %p91
      %p93 = scmp.ne.s32.totalorder %s81, %s82
      %p94 = scmp.eq.s32.totalorder %s25, 1
      %p95 = por %p93, %p94
      %p97 = scmp.ne.s32.totalorder %s82, %s96
      %p98 = scmp.eq.s32.totalorder %s25, 0
      %p99 = por %p97, %p98
      %s101 = sadd.s32 %s100, 1
      %p104 = scmp.eq.s32.totalorder %s19, 1
      %p105 = scmp.ne.s32.totalorder %s100, %s102
      %p106 = scmp.eq.s32.totalorder %s19, 0
      %p107 = por %p105, %p106
      %p108 = scmp.ne.s32.totalorder %s100, %s102
      %p109 = scmp.eq.s32.totalorder %s24, 1
      %p110 = por %p108, %p109
      %p111 = scmp.ne.s32.totalorder %s102, %s103
      %p112 = scmp.eq.s32.totalorder %s24, 0
      %p113 = por %p111, %p112
      %p114 = scmp.ne.s32.totalorder %s102, %s103
      %p115 = scmp.eq.s32.totalorder %s25, 1
      %p116 = por %p114, %p115
      %p118 = scmp.ne.s32.totalorder %s103, %s117
      %p119 = scmp.eq.s32.totalorder %s25, 0
      %p120 = por %p118, %p119
      %s121 = ssub.s32 %s19, %s26
      %p122 = scmp.eq.s32.totalorder %s121, 0
      %s124 = sadd.s32 %s123, 1
      %s125 = scalar_select %p122, %s123, %s124
      %p128 = pneg %p122
      %p129 = scmp.eq.s32.totalorder %s19, 1
      %p130 = por %p128, %p129
      %p131 = scmp.ne.s32.totalorder %s123, %s126
      %p132 = scmp.eq.s32.totalorder %s19, 0
      %p133 = por %p131, %p132
      %p134 = scmp.ne.s32.totalorder %s123, %s126
      %p135 = scmp.eq.s32.totalorder %s24, 1
      %p136 = por %p134, %p135
      %p137 = scmp.ne.s32.totalorder %s126, %s127
      %p138 = scmp.eq.s32.totalorder %s24, 0
      %p139 = por %p137, %p138
      %p140 = scmp.ne.s32.totalorder %s126, %s127
      %p141 = scmp.eq.s32.totalorder %s25, 1
      %p142 = por %p140, %p141
      %p144 = scmp.ne.s32.totalorder %s127, %s143
      %p145 = scmp.eq.s32.totalorder %s25, 0
      %p146 = por %p144, %p145
      %p147 = scmp.le.s32.totalorder 1, %s19
      %p148 = scmp.lt.s32.totalorder %s19, 3
      %p149 = pnand %p147, %p148
      %p150 = pneg %p149
      // Predicated region
      $region9: #{tpu_custom_call.1} parent=5 // pred_check
        _
      $region10: #{tpu_custom_call.1} parent=5 // pred_check_branch
        %152 = sbr.rel (%p149) target = $region12
      $region11: #{tpu_custom_call.1} parent=5 // pred_region
        %s153 = ssub.s32 %s19, 1
        // Predicated region
        $region13: #{tpu_custom_call.1} parent=11 // pred_check
          %p154 = pneg %p92
        $region14: #{tpu_custom_call.1} parent=11 // pred_check_branch
          %156 = sbr.rel (%p154) target = $region16
        $region15: #{tpu_custom_call.1} parent=11 // pred_region
          _
        $region16: #{tpu_custom_call.1} parent=11 // pred_fallthru
          _
        // Predicated region
        $region17: #{tpu_custom_call.1} parent=11 // pred_check
          %p157 = pneg %p113
        $region18: #{tpu_custom_call.1} parent=11 // pred_check_branch
          %159 = sbr.rel (%p157) target = $region20
        $region19: #{tpu_custom_call.1} parent=11 // pred_region
          _
        $region20: #{tpu_custom_call.1} parent=11 // pred_fallthru
          _
      $region12: #{tpu_custom_call.1} parent=5 // pred_fallthru
        _
      %p160 = scmp.lt.s32.totalorder %s19, 2
      // Predicated region
      $region21: #{tpu_custom_call.1} parent=5 // pred_check
        %p161 = pneg %p160
      $region22: #{tpu_custom_call.1} parent=5 // pred_check_branch
        %163 = sbr.rel (%p161) target = $region24
      $region23: #{tpu_custom_call.1} parent=5 // pred_region
        // Predicated region
        $region25: #{tpu_custom_call.1} parent=23 // pred_check
          %p164 = pneg %p39
        $region26: #{tpu_custom_call.1} parent=23 // pred_check_branch
          %166 = sbr.rel (%p164) target = $region28
        $region27: #{tpu_custom_call.1} parent=23 // pred_region
          %s167 = sand.u32 %s29, 1
          %s168 = scalar_lea.sflag [#allocation3], %s167
          %s169 = sand.u32 %s29, 1
          %s170 = smul.addr %s169, 128
          %s171 = scalar_lea.vmem [#allocation2], %s170
          %s172 = smul.u32 8, %s19
          %s174 = ssub.s32 2048, 2048
          %175 = vsyncadd %s168, %s174
          %s176 = smul.addr %s172, 2
          %s177 = smul.addr %s176, 128
          %s178 = scalar_lea.hbm %s0, %s177
          %s179 = sshll.u32 %s171, 4
          %s180 = int_to_ptr.vmem [resolvable:$true] %s179
          %185 = dma.hbm_to_vmem [thread:$0]  %s178, 2048, %s180, %s168, 256, 256, 16
        $region28: #{tpu_custom_call.1} parent=23 // pred_fallthru
          _
        // Predicated region
        $region29: #{tpu_custom_call.1} parent=23 // pred_check
          %p186 = pneg %p65
        $region30: #{tpu_custom_call.1} parent=23 // pred_check_branch
          %188 = sbr.rel (%p186) target = $region32
        $region31: #{tpu_custom_call.1} parent=23 // pred_region
          %s189 = sand.u32 %s55, 1
          %s190 = scalar_lea.sflag [#allocation6], %s189
          %s191 = sand.u32 %s55, 1
          %s192 = smul.addr %s191, 128
          %s193 = scalar_lea.vmem [#allocation5], %s192
          %s194 = smul.u32 8, %s19
          %s196 = ssub.s32 2048, 2048
          %197 = vsyncadd %s190, %s196
          %s198 = smul.addr %s194, 2
          %s199 = smul.addr %s198, 128
          %s200 = scalar_lea.hbm %s1, %s199
          %s201 = sshll.u32 %s193, 4
          %s202 = int_to_ptr.vmem [resolvable:$true] %s201
          %207 = dma.hbm_to_vmem [thread:$0]  %s200, 2048, %s202, %s190, 256, 256, 16
        $region32: #{tpu_custom_call.1} parent=23 // pred_fallthru
          _
      $region24: #{tpu_custom_call.1} parent=5 // pred_fallthru
        _
      %p208 = scmp.le.s32.totalorder 1, %s19
      %p209 = scmp.lt.s32.totalorder %s19, 3
      %p210 = pnand %p208, %p209
      %p211 = pneg %p210
      // Predicated region
      $region33: #{tpu_custom_call.1} parent=5 // pred_check
        _
      $region34: #{tpu_custom_call.1} parent=5 // pred_check_branch
        %213 = sbr.rel (%p210) target = $region36
      $region35: #{tpu_custom_call.1} parent=5 // pred_region
        %s214 = ssub.s32 %s19, 1
        %s215 = sand.u32 %s32, 1
        %s216 = scalar_lea.sflag [#allocation3], %s215
        %s217 = sand.u32 %s32, 1
        %s218 = smul.addr %s217, 128
        %s219 = scalar_lea.vmem [#allocation2], %s218
        // Predicated region
        $region37: #{tpu_custom_call.1} parent=35 // pred_check
          %p220 = pneg %p45
        $region38: #{tpu_custom_call.1} parent=35 // pred_check_branch
          %222 = sbr.rel (%p220) target = $region40
        $region39: #{tpu_custom_call.1} parent=35 // pred_region
          %223 = dma.done %s216, 2048
        $region40: #{tpu_custom_call.1} parent=35 // pred_fallthru
          _
        %s224 = sand.u32 %s58, 1
        %s225 = scalar_lea.sflag [#allocation6], %s224
        %s226 = sand.u32 %s58, 1
        %s227 = smul.addr %s226, 128
        %s228 = scalar_lea.vmem [#allocation5], %s227
        // Predicated region
        $region41: #{tpu_custom_call.1} parent=35 // pred_check
          %p229 = pneg %p71
        $region42: #{tpu_custom_call.1} parent=35 // pred_check_branch
          %231 = sbr.rel (%p229) target = $region44
        $region43: #{tpu_custom_call.1} parent=35 // pred_region
          %232 = dma.done %s225, 2048
        $region44: #{tpu_custom_call.1} parent=35 // pred_fallthru
          _
        %s233 = sand.u32 %s32, 1
        %s234 = scalar_lea.sflag [#allocation3], %s233
        %s235 = sand.u32 %s32, 1
        %s236 = smul.addr %s235, 128
        %s237 = scalar_lea.vmem [#allocation2], %s236
        %p238 = pneg %p45
        %p239 = pneg %p42
        %s240 = sand.u32 %s58, 1
        %s241 = scalar_lea.sflag [#allocation6], %s240
        %s242 = sand.u32 %s58, 1
        %s243 = smul.addr %s242, 128
        %s244 = scalar_lea.vmem [#allocation5], %s243
        %p245 = pneg %p71
        %p246 = pneg %p68
        %p247 = pneg %p92
        %p248 = pneg %p89
        %p249 = pneg %p113
        %p250 = pneg %p110
        %p251 = pneg %p139
        %p252 = pneg %p136
        %s253 = sand.u32 %s126, 1
        %s254 = scalar_lea.sflag [#allocation4], %s253
        %s255 = sand.u32 %s126, 1
        %s256 = smul.addr %s255, 128
        %s257 = scalar_lea.vmem [#allocation7], %s256
        %s258 = smul.u32 8, %s24
        %s259 = smul.u32 8, %s24
        %s260 = smul.u32 8, %s24
        %v261 = vld [vmem:[%s219] sm:$0xff]
        %v262 = vld [vmem:[%s219 + $0x8] sm:$0xff]
        %v263 = vld [vmem:[%s219 + $0x10] sm:$0xff]
        %v264 = vld [vmem:[%s219 + $0x18] sm:$0xff]
        %v265 = vld [vmem:[%s219 + $0x20] sm:$0xff]
        %v266 = vld [vmem:[%s219 + $0x28] sm:$0xff]
        %v267 = vld [vmem:[%s219 + $0x30] sm:$0xff]
        %v268 = vld [vmem:[%s219 + $0x38] sm:$0xff]
        %v269 = vld [vmem:[%s219 + $0x40] sm:$0xff]
        %v270 = vld [vmem:[%s219 + $0x48] sm:$0xff]
        %v271 = vld [vmem:[%s219 + $0x50] sm:$0xff]
        %v272 = vld [vmem:[%s219 + $0x58] sm:$0xff]
        %v273 = vld [vmem:[%s219 + $0x60] sm:$0xff]
        %v274 = vld [vmem:[%s219 + $0x68] sm:$0xff]
        %v275 = vld [vmem:[%s219 + $0x70] sm:$0xff]
        %v276 = vld [vmem:[%s219 + $0x78] sm:$0xff]
        %v277 = vld [vmem:[%s228] sm:$0xff]
        %v278 = vld [vmem:[%s228 + $0x8] sm:$0xff]
        %v279 = vld [vmem:[%s228 + $0x10] sm:$0xff]
        %v280 = vld [vmem:[%s228 + $0x18] sm:$0xff]
        %v281 = vld [vmem:[%s228 + $0x20] sm:$0xff]
        %v282 = vld [vmem:[%s228 + $0x28] sm:$0xff]
        %v283 = vld [vmem:[%s228 + $0x30] sm:$0xff]
        %v284 = vld [vmem:[%s228 + $0x38] sm:$0xff]
        %v285 = vld [vmem:[%s228 + $0x40] sm:$0xff]
        %v286 = vld [vmem:[%s228 + $0x48] sm:$0xff]
        %v287 = vld [vmem:[%s228 + $0x50] sm:$0xff]
        %v288 = vld [vmem:[%s228 + $0x58] sm:$0xff]
        %v289 = vld [vmem:[%s228 + $0x60] sm:$0xff]
        %v290 = vld [vmem:[%s228 + $0x68] sm:$0xff]
        %v291 = vld [vmem:[%s228 + $0x70] sm:$0xff]
        %v292 = vld [vmem:[%s228 + $0x78] sm:$0xff]
        %v293 = vadd.f32 %v261, %v277
        %v294 = vadd.f32 %v262, %v278
        %v295 = vadd.f32 %v263, %v279
        %v296 = vadd.f32 %v264, %v280
        %v297 = vadd.f32 %v265, %v281
        %v298 = vadd.f32 %v266, %v282
        %v299 = vadd.f32 %v267, %v283
        %v300 = vadd.f32 %v268, %v284
        %v301 = vadd.f32 %v269, %v285
        %v302 = vadd.f32 %v270, %v286
        %v303 = vadd.f32 %v271, %v287
        %v304 = vadd.f32 %v272, %v288
        %v305 = vadd.f32 %v273, %v289
        %v306 = vadd.f32 %v274, %v290
        %v307 = vadd.f32 %v275, %v291
        %v308 = vadd.f32 %v276, %v292
        %v309 = vadd.f32 %v293, %v294
        %310 = vadd.xlane.f32.xlu0 %v309
        %v311 = vpop.xlane.xlu0 %310
        %v312 = vadd.f32 %v295, %v296
        %313 = vadd.xlane.f32.xlu0 %v312
        %v314 = vpop.xlane.xlu0 %313
        %v315 = vadd.f32 %v297, %v298
        %316 = vadd.xlane.f32.xlu0 %v315
        %v317 = vpop.xlane.xlu0 %316
        %v318 = vadd.f32 %v299, %v300
        %319 = vadd.xlane.f32.xlu0 %v318
        %v320 = vpop.xlane.xlu0 %319
        %v321 = vadd.f32 %v301, %v302
        %322 = vadd.xlane.f32.xlu0 %v321
        %v323 = vpop.xlane.xlu0 %322
        %v324 = vadd.f32 %v303, %v304
        %325 = vadd.xlane.f32.xlu0 %v324
        %v326 = vpop.xlane.xlu0 %325
        %v327 = vadd.f32 %v305, %v306
        %328 = vadd.xlane.f32.xlu0 %v327
        %v329 = vpop.xlane.xlu0 %328
        %v330 = vadd.f32 %v307, %v308
        %331 = vadd.xlane.f32.xlu0 %v330
        %v332 = vpop.xlane.xlu0 %331
        %v333 = vrcp.pop 256.0
        %v334 = vmul.f32 %v311, %v333
        %v335 = vmul.f32 %v314, %v333
        %v336 = vmul.f32 %v317, %v333
        %v337 = vmul.f32 %v320, %v333
        %v338 = vmul.f32 %v323, %v333
        %v339 = vmul.f32 %v326, %v333
        %v340 = vmul.f32 %v329, %v333
        %v341 = vmul.f32 %v332, %v333
        %v342 = vsub.f32 %v293, %v334
        %v343 = vsub.f32 %v294, %v334
        %v344 = vsub.f32 %v295, %v335
        %v345 = vsub.f32 %v296, %v335
        %v346 = vsub.f32 %v297, %v336
        %v347 = vsub.f32 %v298, %v336
        %v348 = vsub.f32 %v299, %v337
        %v349 = vsub.f32 %v300, %v337
        %v350 = vsub.f32 %v301, %v338
        %v351 = vsub.f32 %v302, %v338
        %v352 = vsub.f32 %v303, %v339
        %v353 = vsub.f32 %v304, %v339
        %v354 = vsub.f32 %v305, %v340
        %v355 = vsub.f32 %v306, %v340
        %v356 = vsub.f32 %v307, %v341
        %v357 = vsub.f32 %v308, %v341
        %v358 = vmul.f32 %v342, %v342
        %v359 = vmul.f32 %v343, %v343
        %v360 = vmul.f32 %v344, %v344
        %v361 = vmul.f32 %v345, %v345
        %v362 = vmul.f32 %v346, %v346
        %v363 = vmul.f32 %v347, %v347
        %v364 = vmul.f32 %v348, %v348
        %v365 = vmul.f32 %v349, %v349
        %v366 = vmul.f32 %v350, %v350
        %v367 = vmul.f32 %v351, %v351
        %v368 = vmul.f32 %v352, %v352
        %v369 = vmul.f32 %v353, %v353
        %v370 = vmul.f32 %v354, %v354
        %v371 = vmul.f32 %v355, %v355
        %v372 = vmul.f32 %v356, %v356
        %v373 = vmul.f32 %v357, %v357
        %v374 = vadd.f32 %v358, %v359
        %375 = vadd.xlane.f32.xlu0 %v374
        %v376 = vpop.xlane.xlu0 %375
        %v377 = vadd.f32 %v360, %v361
        %378 = vadd.xlane.f32.xlu0 %v377
        %v379 = vpop.xlane.xlu0 %378
        %v380 = vadd.f32 %v362, %v363
        %381 = vadd.xlane.f32.xlu0 %v380
        %v382 = vpop.xlane.xlu0 %381
        %v383 = vadd.f32 %v364, %v365
        %384 = vadd.xlane.f32.xlu0 %v383
        %v385 = vpop.xlane.xlu0 %384
        %v386 = vadd.f32 %v366, %v367
        %387 = vadd.xlane.f32.xlu0 %v386
        %v388 = vpop.xlane.xlu0 %387
        %v389 = vadd.f32 %v368, %v369
        %390 = vadd.xlane.f32.xlu0 %v389
        %v391 = vpop.xlane.xlu0 %390
        %v392 = vadd.f32 %v370, %v371
        %393 = vadd.xlane.f32.xlu0 %v392
        %v394 = vpop.xlane.xlu0 %393
        %v395 = vadd.f32 %v372, %v373
        %396 = vadd.xlane.f32.xlu0 %v395
        %v397 = vpop.xlane.xlu0 %396
        %v398 = vmul.f32 %v376, %v333
        %v399 = vmul.f32 %v379, %v333
        %v400 = vmul.f32 %v382, %v333
        %v401 = vmul.f32 %v385, %v333
        %v402 = vmul.f32 %v388, %v333
        %v403 = vmul.f32 %v391, %v333
        %v404 = vmul.f32 %v394, %v333
        %v405 = vmul.f32 %v397, %v333
        %v406 = vadd.f32 %v398, 1e-05
        %v407 = vadd.f32 %v399, 1e-05
        %v408 = vadd.f32 %v400, 1e-05
        %v409 = vadd.f32 %v401, 1e-05
        %v410 = vadd.f32 %v402, 1e-05
        %v411 = vadd.f32 %v403, 1e-05
        %v412 = vadd.f32 %v404, 1e-05
        %v413 = vadd.f32 %v405, 1e-05
        %v414 = vrsqrt.pop %v406
        %v415 = vrsqrt.pop %v407
        %v416 = vrsqrt.pop %v408
        %v417 = vrsqrt.pop %v409
        %v418 = vrsqrt.pop %v410
        %v419 = vrsqrt.pop %v411
        %v420 = vrsqrt.pop %v412
        %v421 = vrsqrt.pop %v413
        %v422 = vld [vmem:[%s2] sm:$0x3]
        %v423 = vld [vmem:[%s3] sm:$0x3]
        %v424 = vmul.f32 %v342, %v414
        %v425 = vmul.f32 %v343, %v414
        %v426 = vmul.f32 %v344, %v415
        %v427 = vmul.f32 %v345, %v415
        %v428 = vmul.f32 %v346, %v416
        %v429 = vmul.f32 %v347, %v416
        %v430 = vmul.f32 %v348, %v417
        %v431 = vmul.f32 %v349, %v417
        %v432 = vmul.f32 %v350, %v418
        %v433 = vmul.f32 %v351, %v418
        %v434 = vmul.f32 %v352, %v419
        %v435 = vmul.f32 %v353, %v419
        %v436 = vmul.f32 %v354, %v420
        %v437 = vmul.f32 %v355, %v420
        %v438 = vmul.f32 %v356, %v421
        %v439 = vmul.f32 %v357, %v421
        %v441 = vlaneseq
        %v442 = vshrl.u32 %v441, 7
        %v443 = vsub.s32 0, %v442
        %v444 = vrot.slane %v422, %v443
        %v445 = vlaneseq
        %v446 = vshrl.u32 %v445, 7
        %v447 = vsub.s32 1, %v446
        %v448 = vrot.slane %v422, %v447
        %v451 = vmul.f32 %v424, %v444
        %v452 = vmul.f32 %v425, %v448
        %v453 = vmul.f32 %v426, %v444
        %v454 = vmul.f32 %v427, %v448
        %v455 = vmul.f32 %v428, %v444
        %v456 = vmul.f32 %v429, %v448
        %v457 = vmul.f32 %v430, %v444
        %v458 = vmul.f32 %v431, %v448
        %v459 = vmul.f32 %v432, %v444
        %v460 = vmul.f32 %v433, %v448
        %v461 = vmul.f32 %v434, %v444
        %v462 = vmul.f32 %v435, %v448
        %v463 = vmul.f32 %v436, %v444
        %v464 = vmul.f32 %v437, %v448
        %v465 = vmul.f32 %v438, %v444
        %v466 = vmul.f32 %v439, %v448
        %v468 = vlaneseq
        %v469 = vshrl.u32 %v468, 7
        %v470 = vsub.s32 0, %v469
        %v471 = vrot.slane %v423, %v470
        %v472 = vlaneseq
        %v473 = vshrl.u32 %v472, 7
        %v474 = vsub.s32 1, %v473
        %v475 = vrot.slane %v423, %v474
        %v478 = vadd.f32 %v451, %v471
        %v479 = vadd.f32 %v452, %v475
        %v480 = vadd.f32 %v453, %v471
        %v481 = vadd.f32 %v454, %v475
        %v482 = vadd.f32 %v455, %v471
        %v483 = vadd.f32 %v456, %v475
        %v484 = vadd.f32 %v457, %v471
        %v485 = vadd.f32 %v458, %v475
        %v486 = vadd.f32 %v459, %v471
        %v487 = vadd.f32 %v460, %v475
        %v488 = vadd.f32 %v461, %v471
        %v489 = vadd.f32 %v462, %v475
        %v490 = vadd.f32 %v463, %v471
        %v491 = vadd.f32 %v464, %v475
        %v492 = vadd.f32 %v465, %v471
        %v493 = vadd.f32 %v466, %v475
        %494 = vst [vmem:[%s257] sm:$0xff] %v478
        %495 = vst [vmem:[%s257 + $0x8] sm:$0xff] %v479
        %496 = vst [vmem:[%s257 + $0x10] sm:$0xff] %v480
        %497 = vst [vmem:[%s257 + $0x18] sm:$0xff] %v481
        %498 = vst [vmem:[%s257 + $0x20] sm:$0xff] %v482
        %499 = vst [vmem:[%s257 + $0x28] sm:$0xff] %v483
        %500 = vst [vmem:[%s257 + $0x30] sm:$0xff] %v484
        %501 = vst [vmem:[%s257 + $0x38] sm:$0xff] %v485
        %502 = vst [vmem:[%s257 + $0x40] sm:$0xff] %v486
        %503 = vst [vmem:[%s257 + $0x48] sm:$0xff] %v487
        %504 = vst [vmem:[%s257 + $0x50] sm:$0xff] %v488
        %505 = vst [vmem:[%s257 + $0x58] sm:$0xff] %v489
        %506 = vst [vmem:[%s257 + $0x60] sm:$0xff] %v490
        %507 = vst [vmem:[%s257 + $0x68] sm:$0xff] %v491
        %508 = vst [vmem:[%s257 + $0x70] sm:$0xff] %v492
        %509 = vst [vmem:[%s257 + $0x78] sm:$0xff] %v493
        %s510 = sand.u32 %s126, 1
        %s511 = scalar_lea.sflag [#allocation4], %s510
        %s512 = sand.u32 %s126, 1
        %s513 = smul.addr %s512, 128
        %s514 = scalar_lea.vmem [#allocation7], %s513
        // Predicated region
        $region45: #{tpu_custom_call.1} parent=35 // pred_check
          %p515 = pneg %p136
        $region46: #{tpu_custom_call.1} parent=35 // pred_check_branch
          %517 = sbr.rel (%p515) target = $region48
        $region47: #{tpu_custom_call.1} parent=35 // pred_region
          %s518 = smul.u32 8, %s24
          %s520 = ssub.s32 2048, 2048
          %521 = vsyncadd %s511, %s520
          %s522 = smul.addr %s518, 2
          %s523 = smul.addr %s522, 128
          %s524 = scalar_lea.hbm %s4, %s523
          %s525 = sshll.u32 %s514, 4
          %s526 = int_to_ptr.vmem [resolvable:$true] %s525
          %531 = dma.vmem_to_hbm [thread:$0]  %s526, 2048, %s524, %s511, 256, 256, 16
        $region48: #{tpu_custom_call.1} parent=35 // pred_fallthru
          _
      $region36: #{tpu_custom_call.1} parent=5 // pred_fallthru
        _
      %p532 = scmp.le.s32.totalorder 2, %s19
      // Predicated region
      $region49: #{tpu_custom_call.1} parent=5 // pred_check
        %p533 = pneg %p532
      $region50: #{tpu_custom_call.1} parent=5 // pred_check_branch
        %535 = sbr.rel (%p533) target = $region52
      $region51: #{tpu_custom_call.1} parent=5 // pred_region
        %s536 = ssub.s32 %s19, 2
        // Predicated region
        $region53: #{tpu_custom_call.1} parent=51 // pred_check
          %p537 = pneg %p142
        $region54: #{tpu_custom_call.1} parent=51 // pred_check_branch
          %539 = sbr.rel (%p537) target = $region56
        $region55: #{tpu_custom_call.1} parent=51 // pred_region
          %s540 = sand.u32 %s127, 1
          %s541 = scalar_lea.sflag [#allocation4], %s540
          %s542 = sand.u32 %s127, 1
          %s543 = smul.addr %s542, 128
          %s544 = scalar_lea.vmem [#allocation7], %s543
          %545 = dma.done %s541, 2048
        $region56: #{tpu_custom_call.1} parent=51 // pred_fallthru
          _
      $region52: #{tpu_custom_call.1} parent=5 // pred_fallthru
        _
    $region6: #{tpu_custom_call.1} parent=1 // loop_footer
      %s23 = sadd.s32 1, %s19
    $region7: #{tpu_custom_call.1} parent=1 // loop_footer_branch
      %18 = sbr.rel target = $region3
    $region8: #{tpu_custom_call.1} parent=1 // loop_exit
      _
    %546 = vsyncpa [#allocation3], 1
    %s547 = scalar_lea.sflag [#allocation3], 1
    %548 = vsyncpa %s547, 1
    %549 = vsyncpa [#allocation6], 1
    %s550 = scalar_lea.sflag [#allocation6], 1
    %551 = vsyncpa %s550, 1
    %552 = vsyncpa [#allocation4], 1
    %s553 = scalar_lea.sflag [#allocation4], 1
    %554 = vsyncpa %s553, 1

</llo_original>
